<compile_context>
chip_gen: v7x
topology: tpu7x:2x2x1
jax: 0.10.0
libtpu: 0.0.40
codegen_flags: <defaults>
</compile_context>

<pallas_src>
import functools

import jax
import jax.numpy as jnp
from jax.experimental import pallas as pl
from jax.experimental.pallas import tpu as pltpu

LOG_SIG_MAX = 2.0
LOG_SIG_MIN = -20.0


def _round_up(x, m):
    return ((x + m - 1) // m) * m


# ----------------------------------------------------------------------------
# Kernel
# ----------------------------------------------------------------------------
def _actor_kernel(s_ref, w1_ref, b1_ref, w2_ref, b2_ref, wh_ref, bh_ref,
                  out_ref, *, action_dim):
    # state tile: load f32, cast to bf16 for the MXU (weights already bf16).
    x = s_ref[...].astype(jnp.bfloat16)

    # hidden layer 1 + ReLU (f32 accumulate, f32 bias/ReLU on the VPU)
    h = jnp.dot(x, w1_ref[...], preferred_element_type=jnp.float32) + b1_ref[...]
    h = jnp.maximum(h, 0.0).astype(jnp.bfloat16)

    # hidden layer 2 + ReLU
    h = jnp.dot(h, w2_ref[...], preferred_element_type=jnp.float32) + b2_ref[...]
    h = jnp.maximum(h, 0.0).astype(jnp.bfloat16)

    # fused heads: one matmul produces [mean | log_std | zero-pad] lanes.
    y = jnp.dot(h, wh_ref[...], preferred_element_type=jnp.float32) + bh_ref[...]

    # clamp only the log_std lanes (in-kernel lane mask; mean lanes untouched).
    lane = jax.lax.broadcasted_iota(jnp.int32, y.shape, 1)
    is_log_std = (lane >= action_dim) & (lane < 2 * action_dim)
    y = jnp.where(is_log_std, jnp.clip(y, LOG_SIG_MIN, LOG_SIG_MAX), y)

    out_ref[...] = y.astype(out_ref.dtype)


# ----------------------------------------------------------------------------
# One-time parameter packing (re-run after every optimizer step)
# ----------------------------------------------------------------------------
def pack_actor_params(params):
    """Pack raw f32 params into the kernel layout.

    Returns a dict of device arrays plus static ints (action_dim, head_pad).
    Weights are stored bf16 (MXU inputs); biases stay f32 (VPU adds).
    """
    w1, b1, w2, b2, wm, bm, wl, bl = params
    hidden_dim = w1.shape[1]
    action_dim = wm.shape[1]

    head_pad = _round_up(max(2 * action_dim, 128), 128)   # lane-dense output
    wh = jnp.zeros((hidden_dim, head_pad), jnp.float32)
    wh = wh.at[:, :action_dim].set(wm)
    wh = wh.at[:, action_dim:2 * action_dim].set(wl)
    bh = jnp.zeros((1, head_pad), jnp.float32)
    bh = bh.at[:, :action_dim].set(bm)
    bh = bh.at[:, action_dim:2 * action_dim].set(bl)

    return {
        "w1": w1.astype(jnp.bfloat16), "b1": b1.astype(jnp.float32),
        "w2": w2.astype(jnp.bfloat16), "b2": b2.astype(jnp.float32),
        "wh": wh.astype(jnp.bfloat16), "bh": bh.astype(jnp.float32),
        "action_dim": int(action_dim), "head_pad": int(head_pad),
    }


# ----------------------------------------------------------------------------
# Forward wrapper
# ----------------------------------------------------------------------------
def actor_forward(state, packed):
    """state: [B, obs_dim] float32. Returns (mean, log_std), each [B, action_dim] f32."""
    w1, b1 = packed["w1"], packed["b1"]
    w2, b2 = packed["w2"], packed["b2"]
    wh, bh = packed["wh"], packed["bh"]
    action_dim = packed["action_dim"]
    head_pad = packed["head_pad"]

    B, obs_dim = state.shape
    hidden_dim = w1.shape[1]

    # ---- batch bucketing: pad to next power of two (>=8) to cap recompiles --
    B_pad = max(8, int(pl.next_power_of_2(int(B))))
    if B_pad != B:
        state = jnp.pad(state, ((0, B_pad - B), (0, 0)))

    # ---- grid: single step for small batches; >=2 steps for B_pad >= 256 so
    #      dimension_semantics=("parallel",) shards across v7x's 2 TensorCores;
    #      tiles capped at 1024 rows (cheap extra steps on single-TC chips). ---
    if B_pad >= 256:
        num_steps = max(2, B_pad // 1024)
    else:
        num_steps = 1
    batch_tile = B_pad // num_steps          # power of two, multiple of 8
    grid = (num_steps,)

    def full_spec(shape):
        # constant index_map -> block stays VMEM-resident across grid steps
        return pl.BlockSpec(shape, lambda i: (0, 0))

    # ---- advisory cost + explicit VMEM budget (sized for v7x's 64 MiB) ------
    mm_flops = 2 * B_pad * (obs_dim * hidden_dim
                            + hidden_dim * hidden_dim
                            + hidden_dim * head_pad)
    weight_bytes = 2 * (w1.size + w2.size + wh.size) + 4 * (b1.size + b2.size + bh.size)
    bytes_accessed = int(B_pad * obs_dim * 4 + B_pad * head_pad * 2 + weight_bytes)
    cost = pl.CostEstimate(flops=int(mm_flops), transcendentals=0,
                           bytes_accessed=bytes_accessed)

    io_bytes = 2 * (batch_tile * obs_dim * 4 + batch_tile * head_pad * 2)  # dbl-buffered
    vmem_need = 2 * weight_bytes + io_bytes
    vmem_limit = int(min(64 * 1024 * 1024, max(32 * 1024 * 1024, 2 * vmem_need)))

    kernel = functools.partial(_actor_kernel, action_dim=action_dim)

    out = pl.pallas_call(
        kernel,
        out_shape=jax.ShapeDtypeStruct((B_pad, head_pad), jnp.bfloat16),
        grid_spec=pl.GridSpec(
            grid=grid,
            in_specs=[
                pl.BlockSpec((batch_tile, obs_dim), lambda i: (i, 0)),
                full_spec(w1.shape), full_spec(b1.shape),
                full_spec(w2.shape), full_spec(b2.shape),
                full_spec(wh.shape), full_spec(bh.shape),
            ],
            out_specs=pl.BlockSpec((batch_tile, head_pad), lambda i: (i, 0)),
        ),
        compiler_params=pltpu.CompilerParams(
            dimension_semantics=("parallel",),
            vmem_limit_bytes=vmem_limit),
        cost_estimate=cost,
    )(state, w1, b1, w2, b2, wh, bh)

    mean = out[:B, :action_dim].astype(jnp.float32)
    log_std = out[:B, action_dim:2 * action_dim].astype(jnp.float32)
    return mean, log_std


# ----------------------------------------------------------------------------
# Init + pure-JAX references
# ----------------------------------------------------------------------------
def init_actor_params(key, obs_dim, action_dim, hidden_dim):
    """PyTorch-Linear-style init (uniform +/- 1/sqrt(fan_in)).
    Weights stored (in, out); biases as (1, out) so they are 2-D on TPU."""
    def linear(k, fan_in, fan_out):
        kw, kb = jax.random.split(k)
        bound = 1.0 / jnp.sqrt(fan_in)
        w = jax.random.uniform(kw, (fan_in, fan_out), jnp.float32, -bound, bound)
        b = jax.random.uniform(kb, (1, fan_out), jnp.float32, -bound, bound)
        return w, b

    k1, k2, k3, k4 = jax.random.split(key, 4)
    w1, b1 = linear(k1, obs_dim, hidden_dim)
    w2, b2 = linear(k2, hidden_dim, hidden_dim)
    wm, bm = linear(k3, hidden_dim, action_dim)
    wl, bl = linear(k4, hidden_dim, action_dim)
    return (w1, b1, w2, b2, wm, bm, wl, bl)


def actor_forward_ref(state, params, *, mirror_bf16=False):
    """Pure-JAX reference. mirror_bf16=True mimics the kernel's bf16 MXU inputs
    and bf16 output cast (for tight comparison); False is the full-f32 module."""
    w1, b1, w2, b2, wm, bm, wl, bl = params
    c = (lambda a: a.astype(jnp.bfloat16)) if mirror_bf16 else (lambda a: a)

    h = jnp.dot(c(state), c(w1), preferred_element_type=jnp.float32) + b1
    h = jnp.maximum(h, 0.0)
    h = jnp.dot(c(h), c(w2), preferred_element_type=jnp.float32) + b2
    h = jnp.maximum(h, 0.0)
    mean = jnp.dot(c(h), c(wm), preferred_element_type=jnp.float32) + bm
    log_std = jnp.dot(c(h), c(wl), preferred_element_type=jnp.float32) + bl
    log_std = jnp.clip(log_std, LOG_SIG_MIN, LOG_SIG_MAX)
    if mirror_bf16:
        mean = mean.astype(jnp.bfloat16).astype(jnp.float32)
        log_std = log_std.astype(jnp.bfloat16).astype(jnp.float32)
    return mean, log_std


if __name__ == "__main__":
    obs_dim, action_dim, hidden_dim = 16, 8, 32

    key = jax.random.PRNGKey(0)
    k_params, _ = jax.random.split(key)
    params = init_actor_params(k_params, obs_dim, action_dim, hidden_dim)
    packed = pack_actor_params(params)        # one-time packing (per param update)

    # batches: multiple-of-8, ragged (padding/bucket path), and large (2-step grid)
    for batch, seed in [(16, 1), (13, 2), (300, 3)]:
        state = jax.random.normal(jax.random.PRNGKey(seed), (batch, obs_dim), jnp.float32)
        mean, log_std = actor_forward(state, packed)
        jax.block_until_ready((mean, log_std))

        assert mean.shape == (batch, action_dim)
        assert log_std.shape == (batch, action_dim)

        # tight check vs. a reference that mirrors the kernel's bf16 casts
        mean_m, log_std_m = actor_forward_ref(state, params, mirror_bf16=True)
        assert jnp.allclose(mean, mean_m, atol=2e-2, rtol=2e-2)
        assert jnp.allclose(log_std, log_std_m, atol=2e-2, rtol=2e-2)

        # sanity check vs. the full-f32 module semantics (looser tolerance)
        mean_f, log_std_f = actor_forward_ref(state, params, mirror_bf16=False)
        assert jnp.allclose(mean, mean_f, atol=6e-2, rtol=6e-2)
        assert jnp.allclose(log_std, log_std_f, atol=6e-2, rtol=6e-2)

    # TODO(synk): Actor.sample() (rsample + tanh-squash log-prob) is a separate
    # stochastic path; only forward() is implemented as the Pallas hot path.
    print("KERNEL_OK")
</pallas_src>

<mosaic_0001>
module attributes {stable_mosaic.version = 11 : i64} {
  func.func @_actor_kernel(%arg0: i32, %arg1: memref<16x16xf32, #tpu.memory_space<vmem>>, %arg2: memref<16x32xbf16, #tpu.memory_space<vmem>>, %arg3: memref<1x32xf32, #tpu.memory_space<vmem>>, %arg4: memref<32x32xbf16, #tpu.memory_space<vmem>>, %arg5: memref<1x32xf32, #tpu.memory_space<vmem>>, %arg6: memref<32x128xbf16, #tpu.memory_space<vmem>>, %arg7: memref<1x128xf32, #tpu.memory_space<vmem>>, %arg8: memref<16x128xbf16, #tpu.memory_space<vmem>>) attributes {dimension_semantics = [#tpu.dimension_semantics<parallel>], iteration_bounds = array<i64: 1>, scalar_prefetch = 0 : i64, scratch_operands = 0 : i64, tpu.core_type = #tpu.core_type<tc>, window_params = [{transform_indices = @transform_0, window_bounds = array<i64: 16, 16>}, {pipeline_mode = #tpu.pipeline_mode<synchronous>, transform_indices = @transform_1, window_bounds = array<i64: 16, 32>}, {pipeline_mode = #tpu.pipeline_mode<synchronous>, transform_indices = @transform_2, window_bounds = array<i64: 1, 32>}, {pipeline_mode = #tpu.pipeline_mode<synchronous>, transform_indices = @transform_3, window_bounds = array<i64: 32, 32>}, {pipeline_mode = #tpu.pipeline_mode<synchronous>, transform_indices = @transform_4, window_bounds = array<i64: 1, 32>}, {pipeline_mode = #tpu.pipeline_mode<synchronous>, transform_indices = @transform_5, window_bounds = array<i64: 32, 128>}, {pipeline_mode = #tpu.pipeline_mode<synchronous>, transform_indices = @transform_6, window_bounds = array<i64: 1, 128>}, {transform_indices = @transform_7, window_bounds = array<i64: 16, 128>}]} {
    %c0 = arith.constant 0 : index
    %c0_0 = arith.constant 0 : index
    %0 = vector.load %arg1[%c0, %c0_0] : memref<16x16xf32, #tpu.memory_space<vmem>>, vector<16x16xf32>
    %1 = arith.truncf %0 : vector<16x16xf32> to vector<16x16xbf16>
    %c0_1 = arith.constant 0 : index
    %c0_2 = arith.constant 0 : index
    %2 = vector.load %arg2[%c0_1, %c0_2] : memref<16x32xbf16, #tpu.memory_space<vmem>>, vector<16x32xbf16>
    %cst = arith.constant dense<0.000000e+00> : vector<16x32xf32>
    %3 = tpu.matmul %1, %2, %cst {dimension_numbers = #tpu.dot_dimension_numbers<[1], [0], [0], [1], [0, 0, 1, 1], [], []>} : vector<16x16xbf16>, vector<16x32xbf16>, vector<16x32xf32> -> vector<16x32xf32>
    %c0_3 = arith.constant 0 : index
    %c0_4 = arith.constant 0 : index
    %4 = vector.load %arg3[%c0_3, %c0_4] : memref<1x32xf32, #tpu.memory_space<vmem>>, vector<1x32xf32>
    %5 = vector.broadcast %4 : vector<1x32xf32> to vector<16x32xf32>
    %6 = arith.addf %3, %5 : vector<16x32xf32>
    %cst_5 = arith.constant 0.000000e+00 : f32
    %7 = vector.broadcast %cst_5 : f32 to vector<16x32xf32>
    %8 = arith.maximumf %6, %7 : vector<16x32xf32>
    %9 = arith.truncf %8 : vector<16x32xf32> to vector<16x32xbf16>
    %c0_6 = arith.constant 0 : index
    %c0_7 = arith.constant 0 : index
    %10 = vector.load %arg4[%c0_6, %c0_7] : memref<32x32xbf16, #tpu.memory_space<vmem>>, vector<32x32xbf16>
    %cst_8 = arith.constant dense<0.000000e+00> : vector<16x32xf32>
    %11 = tpu.matmul %9, %10, %cst_8 {dimension_numbers = #tpu.dot_dimension_numbers<[1], [0], [0], [1], [0, 0, 1, 1], [], []>} : vector<16x32xbf16>, vector<32x32xbf16>, vector<16x32xf32> -> vector<16x32xf32>
    %c0_9 = arith.constant 0 : index
    %c0_10 = arith.constant 0 : index
    %12 = vector.load %arg5[%c0_9, %c0_10] : memref<1x32xf32, #tpu.memory_space<vmem>>, vector<1x32xf32>
    %13 = vector.broadcast %12 : vector<1x32xf32> to vector<16x32xf32>
    %14 = arith.addf %11, %13 : vector<16x32xf32>
    %cst_11 = arith.constant 0.000000e+00 : f32
    %15 = vector.broadcast %cst_11 : f32 to vector<16x32xf32>
    %16 = arith.maximumf %14, %15 : vector<16x32xf32>
    %17 = arith.truncf %16 : vector<16x32xf32> to vector<16x32xbf16>
    %c0_12 = arith.constant 0 : index
    %c0_13 = arith.constant 0 : index
    %18 = vector.load %arg6[%c0_12, %c0_13] : memref<32x128xbf16, #tpu.memory_space<vmem>>, vector<32x128xbf16>
    %cst_14 = arith.constant dense<0.000000e+00> : vector<16x128xf32>
    %19 = tpu.matmul %17, %18, %cst_14 {dimension_numbers = #tpu.dot_dimension_numbers<[1], [0], [0], [1], [0, 0, 1, 1], [], []>} : vector<16x32xbf16>, vector<32x128xbf16>, vector<16x128xf32> -> vector<16x128xf32>
    %c0_15 = arith.constant 0 : index
    %c0_16 = arith.constant 0 : index
    %20 = vector.load %arg7[%c0_15, %c0_16] : memref<1x128xf32, #tpu.memory_space<vmem>>, vector<1x128xf32>
    %21 = vector.broadcast %20 : vector<1x128xf32> to vector<16x128xf32>
    %22 = arith.addf %19, %21 : vector<16x128xf32>
    %23 = tpu.iota {dimensions = array<i32: 1>} : vector<16x128xi32>
    %c8_i32 = arith.constant 8 : i32
    %24 = vector.broadcast %c8_i32 : i32 to vector<16x128xi32>
    %25 = arith.cmpi sge, %23, %24 : vector<16x128xi32>
    %c16_i32 = arith.constant 16 : i32
    %26 = vector.broadcast %c16_i32 : i32 to vector<16x128xi32>
    %27 = arith.cmpi slt, %23, %26 : vector<16x128xi32>
    %28 = arith.andi %25, %27 : vector<16x128xi1>
    %cst_17 = arith.constant -2.000000e+01 : f32
    %cst_18 = arith.constant 2.000000e+00 : f32
    %29 = vector.broadcast %cst_17 : f32 to vector<16x128xf32>
    %30 = arith.maximumf %29, %22 : vector<16x128xf32>
    %31 = vector.broadcast %cst_18 : f32 to vector<16x128xf32>
    %32 = arith.minimumf %31, %30 : vector<16x128xf32>
    %33 = arith.select %28, %32, %22 : vector<16x128xi1>, vector<16x128xf32>
    %34 = arith.truncf %33 : vector<16x128xf32> to vector<16x128xbf16>
    %c0_19 = arith.constant 0 : index
    %c0_20 = arith.constant 0 : index
    %35 = vector.load %arg8[%c0_19, %c0_20] : memref<16x128xbf16, #tpu.memory_space<vmem>>, vector<16x128xbf16>
    tpu.vector_store %arg8[%c0_19, %c0_20], %34 {strides = array<i32>} : memref<16x128xbf16, #tpu.memory_space<vmem>>, vector<16x128xbf16>,
    return
  }
  func.func @transform_0(%arg0: i32) -> (i32, i32) {
    %c0_i32 = arith.constant 0 : i32
    %c0_i32_0 = arith.constant 0 : i32
    return %arg0, %c0_i32 : i32, i32
  }
  func.func @transform_1(%arg0: i32) -> (i32, i32) {
    %c0_i32 = arith.constant 0 : i32
    %c0_i32_0 = arith.constant 0 : i32
    %c0_i32_1 = arith.constant 0 : i32
    return %c0_i32, %c0_i32_0 : i32, i32
  }
  func.func @transform_2(%arg0: i32) -> (i32, i32) {
    %c0_i32 = arith.constant 0 : i32
    %c0_i32_0 = arith.constant 0 : i32
    %c0_i32_1 = arith.constant 0 : i32
    return %c0_i32, %c0_i32_0 : i32, i32
  }
  func.func @transform_3(%arg0: i32) -> (i32, i32) {
    %c0_i32 = arith.constant 0 : i32
    %c0_i32_0 = arith.constant 0 : i32
    %c0_i32_1 = arith.constant 0 : i32
    return %c0_i32, %c0_i32_0 : i32, i32
  }
  func.func @transform_4(%arg0: i32) -> (i32, i32) {
    %c0_i32 = arith.constant 0 : i32
    %c0_i32_0 = arith.constant 0 : i32
    %c0_i32_1 = arith.constant 0 : i32
    return %c0_i32, %c0_i32_0 : i32, i32
  }
  func.func @transform_5(%arg0: i32) -> (i32, i32) {
    %c0_i32 = arith.constant 0 : i32
    %c0_i32_0 = arith.constant 0 : i32
    %c0_i32_1 = arith.constant 0 : i32
    return %c0_i32, %c0_i32_0 : i32, i32
  }
  func.func @transform_6(%arg0: i32) -> (i32, i32) {
    %c0_i32 = arith.constant 0 : i32
    %c0_i32_0 = arith.constant 0 : i32
    %c0_i32_1 = arith.constant 0 : i32
    return %c0_i32, %c0_i32_0 : i32, i32
  }
  func.func @transform_7(%arg0: i32) -> (i32, i32) {
    %c0_i32 = arith.constant 0 : i32
    %c0_i32_0 = arith.constant 0 : i32
    return %arg0, %c0_i32 : i32, i32
  }
}

</mosaic_0001>

<llo_original>
// kernel: tpu_custom_call.1
$region0: #{tpu_custom_call.1}
  #allocation0 [shape = 'u32[]', space=smem, size = 0x4, offset = 0x4, fixed_abs, tag = 'smem constant byte address 0x4 - core index']
  #allocation1 [shape = 'u32[144,128]{1,0:T(1,128)}', space=vmem, size = 0x12000, scoped, tag = 'internal scratch']
  %s0 = inlined_call_operand.hbm [shape: f32[16,16], index: 0, kind: input, shape index: {}]
  %s1 = inlined_call_operand.hbm [shape: bf16[16,32], index: 1, kind: input, shape index: {}]
  %s2 = inlined_call_operand.vmem [shape: f32[1,32], index: 2, kind: input, shape index: {}]
  %s3 = inlined_call_operand.hbm [shape: bf16[32,32], index: 3, kind: input, shape index: {}]
  %s4 = inlined_call_operand.vmem [shape: f32[1,32], index: 4, kind: input, shape index: {}]
  %s5 = inlined_call_operand.vmem [shape: bf16[32,128], index: 5, kind: input, shape index: {}]
  %s6 = inlined_call_operand.vmem [shape: f32[1,128], index: 6, kind: input, shape index: {}]
  %s7 = inlined_call_operand.hbm [shape: bf16[16,128], index: 7, kind: output, shape index: {}]
  %s8 = sld [smem:[#allocation0]]
  $region50: #{tpu_custom_call.1} parent=0
    _
  %s10 = ssub.s32 1, %s8
  %s11 = scalar_select 0, %s10, %s8
  $region1: #{tpu_custom_call.1} parent=0
    #allocation2 [shape = 'u8[8192]{0}', space=vmem, size = 0x2000, scoped, tag = 'input window, operand 0, single buffered']
    #allocation3 [shape = 's32[1]{0}', space=sflag, size = 0x4, scoped, tag = 'scoped memory for tpu_custom_call.1']
    #allocation4 [shape = 's32[1]{0}', space=sflag, size = 0x4, scoped, tag = 'scoped memory for tpu_custom_call.1']
    #allocation5 [shape = 'u8[4096]{0}', space=vmem, size = 0x1000, scoped, tag = 'input window, operand 1, single buffered']
    #allocation6 [shape = 's32[1]{0}', space=sflag, size = 0x4, scoped, tag = 'scoped memory for tpu_custom_call.1']
    #allocation7 [shape = 'u8[8192]{0}', space=vmem, size = 0x2000, scoped, tag = 'input window, operand 3, single buffered']
    #allocation8 [shape = 'u8[4096]{0}', space=vmem, size = 0x1000, scoped, tag = 'output window, operand 0, single buffered']
    %12 = vsyncpa [#allocation3], 0
    %13 = vsyncpa [#allocation6], 0
    %14 = vsyncpa [#allocation4], 0
    // Predicated region
    $region2: #{tpu_custom_call.1} parent=1 // pred_check
      _
    $region3: #{tpu_custom_call.1} parent=1 // pred_check_branch
      %16 = sbr.rel (0) target = $region5
    $region4: #{tpu_custom_call.1} parent=1 // pred_region
      %s18 = ssub.s32 256, 256
      %19 = vsyncadd [#allocation3], %s18
      %s20 = sshll.u32 [#allocation2], 4
      %s21 = int_to_ptr.vmem [resolvable:$true] %s20
      %26 = dma.hbm_to_vmem [thread:$0]  %s0, 256, %s21, [#allocation3], 128, 128, 8
    $region5: #{tpu_custom_call.1} parent=1 // pred_fallthru
      _
    // Predicated region
    $region6: #{tpu_custom_call.1} parent=1 // pred_check
      _
    $region7: #{tpu_custom_call.1} parent=1 // pred_check_branch
      %28 = sbr.rel (0) target = $region9
    $region8: #{tpu_custom_call.1} parent=1 // pred_region
      %s30 = ssub.s32 128, 128
      %31 = vsyncadd [#allocation6], %s30
      %s32 = sshll.u32 [#allocation5], 4
      %s33 = int_to_ptr.vmem [resolvable:$true] %s32
      %38 = dma.hbm_to_vmem [thread:$0]  %s1, 128, %s33, [#allocation6], 64, 64, 4
    $region9: #{tpu_custom_call.1} parent=1 // pred_fallthru
      _
    // Predicated region
    $region10: #{tpu_custom_call.1} parent=1 // pred_check
      _
    $region11: #{tpu_custom_call.1} parent=1 // pred_check_branch
      %40 = sbr.rel (0) target = $region13
    $region12: #{tpu_custom_call.1} parent=1 // pred_region
      _
    $region13: #{tpu_custom_call.1} parent=1 // pred_fallthru
      _
    // Predicated region
    $region14: #{tpu_custom_call.1} parent=1 // pred_check
      _
    $region15: #{tpu_custom_call.1} parent=1 // pred_check_branch
      %42 = sbr.rel (0) target = $region17
    $region16: #{tpu_custom_call.1} parent=1 // pred_region
      %s44 = ssub.s32 256, 256
      %45 = vsyncadd [#allocation6], %s44
      %s46 = sshll.u32 [#allocation7], 4
      %s47 = int_to_ptr.vmem [resolvable:$true] %s46
      %52 = dma.hbm_to_vmem [thread:$0]  %s3, 256, %s47, [#allocation6], 64, 64, 4
    $region17: #{tpu_custom_call.1} parent=1 // pred_fallthru
      _
    // Predicated region
    $region18: #{tpu_custom_call.1} parent=1 // pred_check
      _
    $region19: #{tpu_custom_call.1} parent=1 // pred_check_branch
      %54 = sbr.rel (0) target = $region21
    $region20: #{tpu_custom_call.1} parent=1 // pred_region
      _
    $region21: #{tpu_custom_call.1} parent=1 // pred_fallthru
      _
    // Predicated region
    $region22: #{tpu_custom_call.1} parent=1 // pred_check
      _
    $region23: #{tpu_custom_call.1} parent=1 // pred_check_branch
      %56 = sbr.rel (0) target = $region25
    $region24: #{tpu_custom_call.1} parent=1 // pred_region
      _
    $region25: #{tpu_custom_call.1} parent=1 // pred_fallthru
      _
    // Predicated region
    $region26: #{tpu_custom_call.1} parent=1 // pred_check
      _
    $region27: #{tpu_custom_call.1} parent=1 // pred_check_branch
      %58 = sbr.rel (0) target = $region29
    $region28: #{tpu_custom_call.1} parent=1 // pred_region
      _
    $region29: #{tpu_custom_call.1} parent=1 // pred_fallthru
      _
    // Predicated region
    $region30: #{tpu_custom_call.1} parent=1 // pred_check
      _
    $region31: #{tpu_custom_call.1} parent=1 // pred_check_branch
      %60 = sbr.rel (0) target = $region33
    $region32: #{tpu_custom_call.1} parent=1 // pred_region
      %61 = dma.done [#allocation3], 256
    $region33: #{tpu_custom_call.1} parent=1 // pred_fallthru
      _
    // Predicated region
    $region34: #{tpu_custom_call.1} parent=1 // pred_check
      _
    $region35: #{tpu_custom_call.1} parent=1 // pred_check_branch
      %63 = sbr.rel (0) target = $region37
    $region36: #{tpu_custom_call.1} parent=1 // pred_region
      %64 = dma.done [#allocation6], 128
    $region37: #{tpu_custom_call.1} parent=1 // pred_fallthru
      _
    // Predicated region
    $region38: #{tpu_custom_call.1} parent=1 // pred_check
      _
    $region39: #{tpu_custom_call.1} parent=1 // pred_check_branch
      %66 = sbr.rel (0) target = $region41
    $region40: #{tpu_custom_call.1} parent=1 // pred_region
      %67 = dma.done [#allocation6], 256
    $region41: #{tpu_custom_call.1} parent=1 // pred_fallthru
      _
    %v69 = vld [vmem:[#allocation2] sm:$0xff]
    %v70 = vld [vmem:[#allocation2 + $0x8] sm:$0xff]
    %v71 = vpack.c.bf16 %v70, %v69
    %v72 = vld [vmem:[#allocation5] sm:$0xf]
    %v73 = vld [vmem:[#allocation5 + $0x4] sm:$0xf]
    %v74 = vld [vmem:[%s2] sm:$0x1]
    %v76 = vlaneseq
    %v77 = vshrl.u32 %v76, 7
    %v78 = vsub.s32 0, %v77
    %v79 = vrot.slane %v74, %v78
    %v83 = vunpack.c.l.b16 %v72
    %v84 = vunpack.c.l.b16 %v73
    %v85 = vpack.c.b16 %v84, %v83
    %vm87 = vcmask 130048
    %v89 = vsel %vm87, %v71, 0
    %91 = vmatprep.subr.bf16.mxu0 0
    %92 = vmatpush1.bf16.msra.mxu0 %v85
    %93 = vmatprep.subr.bf16.mxu0 0
    %94 = vmatpush1.bf16.msra.mxu0 0
    %95 = vmatprep.subr.bf16.mxu0 0
    %96 = vmatpush1.bf16.msra.mxu0 0
    %97 = vmatprep.subr.bf16.mxu0 0
    %98 = vmatpush1.bf16.msra.mxu0 0
    %99 = vmatprep.subr.bf16.mxu0 0
    %100 = vmatpush1.bf16.msra.mxu0 0
    %101 = vmatprep.subr.bf16.mxu0 0
    %102 = vmatpush1.bf16.msra.mxu0 0
    %103 = vmatprep.subr.bf16.mxu0 0
    %104 = vmatpush1.bf16.msra.mxu0 0
    %105 = vmatprep.subr.bf16.mxu0 0
    %106 = vmatpush1.bf16.msra.mxu0 0
    %107 = vmatprep.subr.bf16.mxu0 0
    %108 = vmatpush1.bf16.msra.mxu0 0
    %109 = vmatprep.subr.bf16.mxu0 0
    %110 = vmatpush1.bf16.msra.mxu0 0
    %111 = vmatprep.subr.bf16.mxu0 0
    %112 = vmatpush1.bf16.msra.mxu0 0
    %113 = vmatprep.subr.bf16.mxu0 0
    %114 = vmatpush1.bf16.msra.mxu0 0
    %115 = vmatprep.subr.bf16.mxu0 0
    %116 = vmatpush1.bf16.msra.mxu0 0
    %117 = vmatprep.subr.bf16.mxu0 0
    %118 = vmatpush1.bf16.msra.mxu0 0
    %119 = vmatprep.subr.bf16.mxu0 0
    %120 = vmatpush1.bf16.msra.mxu0 0
    %121 = vmatprep.subr.bf16.mxu0 0
    %122 = vmatpush1.bf16.msra.mxu0 0
    %123 = vmatprep.mubr.bf16.mxu0 0
    %124 = vmatmul.mubr.bf16.gmra.mrb[0].mxu0 %v89
    %v125 = vpop.f32.mrb[0].mxu0
    %v126 = vadd.f32 %v79, %v125
    %v127 = vpop.f32.mrb[0].mxu0
    %v128 = vpop.f32.mrb[0].mxu0
    %v129 = vadd.f32 %v79, %v128
    %v130 = vpop.f32.mrb[0].mxu0
    %131 = vdwg.mxu0
    %v132 = vmax.f32 %v126, 0.0
    %v133 = vmax.f32 %v129, 0.0
    %v134 = vpack.c.bf16 %v133, %v132
    %v135 = vld [vmem:[#allocation7] sm:$0xf]
    %v136 = vld [vmem:[#allocation7 + $0x4] sm:$0xf]
    %v137 = vld [vmem:[#allocation7 + $0x8] sm:$0xf]
    %v138 = vld [vmem:[#allocation7 + $0xc] sm:$0xf]
    %v139 = vld [vmem:[%s4] sm:$0x1]
    %v141 = vlaneseq
    %v142 = vshrl.u32 %v141, 7
    %v143 = vsub.s32 0, %v142
    %v144 = vrot.slane %v139, %v143
    %v150 = vunpack.c.l.b16 %v135
    %v151 = vunpack.c.l.b16 %v136
    %v152 = vunpack.c.l.b16 %v137
    %v153 = vunpack.c.l.b16 %v138
    %v154 = vpack.c.b16 %v151, %v150
    %v155 = vpack.c.b16 %v153, %v152
    %vm158 = vcmask 261120
    %v160 = vsel %vm158, %v134, 0
    %162 = vmatprep.subr.bf16.mxu0 0
    %163 = vmatpush1.bf16.msra.mxu0 %v154
    %164 = vmatprep.subr.bf16.mxu0 0
    %165 = vmatpush1.bf16.msra.mxu0 %v155
    %166 = vmatprep.subr.bf16.mxu0 0
    %167 = vmatpush1.bf16.msra.mxu0 0
    %168 = vmatprep.subr.bf16.mxu0 0
    %169 = vmatpush1.bf16.msra.mxu0 0
    %170 = vmatprep.subr.bf16.mxu0 0
    %171 = vmatpush1.bf16.msra.mxu0 0
    %172 = vmatprep.subr.bf16.mxu0 0
    %173 = vmatpush1.bf16.msra.mxu0 0
    %174 = vmatprep.subr.bf16.mxu0 0
    %175 = vmatpush1.bf16.msra.mxu0 0
    %176 = vmatprep.subr.bf16.mxu0 0
    %177 = vmatpush1.bf16.msra.mxu0 0
    %178 = vmatprep.subr.bf16.mxu0 0
    %179 = vmatpush1.bf16.msra.mxu0 0
    %180 = vmatprep.subr.bf16.mxu0 0
    %181 = vmatpush1.bf16.msra.mxu0 0
    %182 = vmatprep.subr.bf16.mxu0 0
    %183 = vmatpush1.bf16.msra.mxu0 0
    %184 = vmatprep.subr.bf16.mxu0 0
    %185 = vmatpush1.bf16.msra.mxu0 0
    %186 = vmatprep.subr.bf16.mxu0 0
    %187 = vmatpush1.bf16.msra.mxu0 0
    %188 = vmatprep.subr.bf16.mxu0 0
    %189 = vmatpush1.bf16.msra.mxu0 0
    %190 = vmatprep.subr.bf16.mxu0 0
    %191 = vmatpush1.bf16.msra.mxu0 0
    %192 = vmatprep.subr.bf16.mxu0 0
    %193 = vmatpush1.bf16.msra.mxu0 0
    %194 = vmatprep.mubr.bf16.mxu0 0
    %195 = vmatmul.mubr.bf16.gmra.mrb[0].mxu0 %v160
    %v196 = vpop.f32.mrb[0].mxu0
    %v197 = vadd.f32 %v144, %v196
    %v198 = vpop.f32.mrb[0].mxu0
    %v199 = vpop.f32.mrb[0].mxu0
    %v200 = vadd.f32 %v144, %v199
    %v201 = vpop.f32.mrb[0].mxu0
    %202 = vdwg.mxu0
    %v203 = vmax.f32 %v197, 0.0
    %v204 = vmax.f32 %v200, 0.0
    %v205 = vpack.c.bf16 %v204, %v203
    %v206 = vld [vmem:[%s5] sm:$0xf]
    %v207 = vld [vmem:[%s5 + $0x4] sm:$0xf]
    %v208 = vld [vmem:[%s5 + $0x8] sm:$0xf]
    %v209 = vld [vmem:[%s5 + $0xc] sm:$0xf]
    %v210 = vld [vmem:[%s6] sm:$0x1]
    %v212 = vlaneseq
    %v213 = vshrl.u32 %v212, 7
    %v214 = vsub.s32 0, %v213
    %v215 = vrot.slane %v210, %v214
    %v221 = vunpack.c.l.b16 %v206
    %v222 = vunpack.c.l.b16 %v207
    %v223 = vunpack.c.l.b16 %v208
    %v224 = vunpack.c.l.b16 %v209
    %v225 = vpack.c.b16 %v222, %v221
    %v226 = vpack.c.b16 %v224, %v223
    %v230 = vsel %vm158, %v205, 0
    %232 = vmatprep.subr.bf16.mxu0 0
    %233 = vmatpush1.bf16.msra.mxu0 %v225
    %234 = vmatprep.subr.bf16.mxu0 0
    %235 = vmatpush1.bf16.msra.mxu0 %v226
    %236 = vmatprep.subr.bf16.mxu0 0
    %237 = vmatpush1.bf16.msra.mxu0 0
    %238 = vmatprep.subr.bf16.mxu0 0
    %239 = vmatpush1.bf16.msra.mxu0 0
    %240 = vmatprep.subr.bf16.mxu0 0
    %241 = vmatpush1.bf16.msra.mxu0 0
    %242 = vmatprep.subr.bf16.mxu0 0
    %243 = vmatpush1.bf16.msra.mxu0 0
    %244 = vmatprep.subr.bf16.mxu0 0
    %245 = vmatpush1.bf16.msra.mxu0 0
    %246 = vmatprep.subr.bf16.mxu0 0
    %247 = vmatpush1.bf16.msra.mxu0 0
    %248 = vmatprep.subr.bf16.mxu0 0
    %249 = vmatpush1.bf16.msra.mxu0 0
    %250 = vmatprep.subr.bf16.mxu0 0
    %251 = vmatpush1.bf16.msra.mxu0 0
    %252 = vmatprep.subr.bf16.mxu0 0
    %253 = vmatpush1.bf16.msra.mxu0 0
    %254 = vmatprep.subr.bf16.mxu0 0
    %255 = vmatpush1.bf16.msra.mxu0 0
    %256 = vmatprep.subr.bf16.mxu0 0
    %257 = vmatpush1.bf16.msra.mxu0 0
    %258 = vmatprep.subr.bf16.mxu0 0
    %259 = vmatpush1.bf16.msra.mxu0 0
    %260 = vmatprep.subr.bf16.mxu0 0
    %261 = vmatpush1.bf16.msra.mxu0 0
    %262 = vmatprep.subr.bf16.mxu0 0
    %263 = vmatpush1.bf16.msra.mxu0 0
    %264 = vmatprep.mubr.bf16.mxu0 0
    %265 = vmatmul.mubr.bf16.gmra.mrb[0].mxu0 %v230
    %v266 = vpop.f32.mrb[0].mxu0
    %v267 = vadd.f32 %v215, %v266
    %v268 = vpop.f32.mrb[0].mxu0
    %v269 = vpop.f32.mrb[0].mxu0
    %v270 = vadd.f32 %v215, %v269
    %v271 = vpop.f32.mrb[0].mxu0
    %272 = vdwg.mxu0
    %v273 = vlaneseq
    %v274 = vand.u32 %v273, 127
    %vm275 = vcmp.ge.s32.totalorder %v274, 8
    %vm276 = vcmp.lt.s32.totalorder %v274, 16
    %vm277 = vmand %vm275, %vm276
    %v278 = vmax.f32 %v267, -20.0
    %v279 = vmax.f32 %v270, -20.0
    %v280 = vmin.f32 %v278, 2.0
    %v281 = vmin.f32 %v279, 2.0
    %v282 = vsel %vm277, %v280, %v267
    %v283 = vsel %vm277, %v281, %v270
    %v284 = vpack.c.bf16 %v283, %v282
    %v286 = vunpack.c.l.b16 %v284
    %v287 = vunpack.c.h.b16 %v284
    %v288 = vpack.c.b16 %v286, %v286
    %v289 = vpack.c.b16 %v287, %v287
    %292 = vst [vmem:[#allocation8] sm:$0xf] %v288
    %293 = vst [vmem:[#allocation8 + $0x4] sm:$0xf] %v289
    // Predicated region
    $region42: #{tpu_custom_call.1} parent=1 // pred_check
      _
    $region43: #{tpu_custom_call.1} parent=1 // pred_check_branch
      %295 = sbr.rel (0) target = $region45
    $region44: #{tpu_custom_call.1} parent=1 // pred_region
      %s297 = ssub.s32 128, 128
      %298 = vsyncadd [#allocation4], %s297
      %s299 = sshll.u32 [#allocation8], 4
      %s300 = int_to_ptr.vmem [resolvable:$true] %s299
      %305 = dma.vmem_to_hbm [thread:$0]  %s300, 128, %s7, [#allocation4], 64, 64, 4
    $region45: #{tpu_custom_call.1} parent=1 // pred_fallthru
      _
    // Predicated region
    $region46: #{tpu_custom_call.1} parent=1 // pred_check
      _
    $region47: #{tpu_custom_call.1} parent=1 // pred_check_branch
      %307 = sbr.rel (0) target = $region49
    $region48: #{tpu_custom_call.1} parent=1 // pred_region
      %308 = dma.done [#allocation4], 128
    $region49: #{tpu_custom_call.1} parent=1 // pred_fallthru
      _
    %309 = vsyncpa [#allocation3], 1
    %310 = vsyncpa [#allocation6], 1
    %311 = vsyncpa [#allocation4], 1

</llo_original>
